<compile_context>
chip_gen: v7x
topology: tpu7x:2x2x1
jax: 0.10.0
libtpu: 0.0.40
codegen_flags: <defaults>
</compile_context>

<pallas_src>
import functools

import jax
import jax.numpy as jnp
from jax import lax, random
from jax.experimental import pallas as pl
from jax.experimental.pallas import tpu as pltpu


# ------------------------------ chip detection --------------------------------- #

def _device_kind():
    try:
        return jax.devices()[0].device_kind.lower()
    except Exception:
        return ""


def _bf16_epilogue_ok(kind=None):
    """bf16 VALU exists on v6e / v7x; keep the f32 epilogue elsewhere (e.g. v5e)."""
    kind = _device_kind() if kind is None else kind
    return ("v6" in kind) or ("v7" in kind) or ("7x" in kind)


def _has_two_tensorcores(kind=None):
    """v7x has 2 TensorCores per chip; v5e/v6e have 1."""
    kind = _device_kind() if kind is None else kind
    return ("v7" in kind) or ("7x" in kind)


def _round_up(n, m):
    return ((n + m - 1) // m) * m


def _pick_batch_block(B, two_tc):
    """Chip-aware batch block + VMEM limit (review items 1 & 2)."""
    if B < 32:
        # Tiny batch: a single block; splitting would only add per-step overhead and
        # sub-(16,128) blocks.
        return B, 32 * 1024 * 1024
    if two_tc:
        # v7x: guarantee >= 2 grid steps so "parallel" shards across both TCs.
        bt = min(256, _round_up(pl.cdiv(B, 2), 16))
    else:
        # v5e/v6e: single TC -> big blocks to amortize per-step overhead.
        bt = 1024 if B >= 2048 else min(512, _round_up(B, 16))
    vmem = 64 * 1024 * 1024 if bt >= 1024 else 32 * 1024 * 1024
    return bt, vmem


# ----------------------------- fused Pallas kernel ----------------------------- #

def _fused_cnn_kernel(x_ref, t1_ref, b1_ref, t2_ref, b2_ref,
                      w1_ref, fb1_ref, w2_ref, fb2_ref, w3_ref, fb3_ref,
                      o_ref, *, epi_dtype):
    """Entire SimpleCNN2D forward for one batch block, fully VMEM-resident.

    x_ref : (BT, 64)   f32        flattened 8x8 input, (h, w) order
    t1    : (64, 1024) bf16       conv1 as dense matrix, cols ordered (hp, wp, ho, wo, c)
    t2    : (256, 512) bf16       conv2 as dense matrix, cols ordered (hp, wp, ho, wo, c)
    w1/2/3: (128, 128) bf16       fc weights (flatten-permuted, zero-padded to 128)
    b*    : (1, N)     epi_dtype  biases (bf16 on v6e/v7x, f32 on v5e)
    o_ref : (BT, 128)  bf16       padded logits (first num_classes columns are real)
    """

    def mm_bias(a, w_ref, b_ref):
        # Single-pass bf16 MXU matmul with f32 accumulation; epilogue in epi_dtype.
        y = jnp.dot(a.astype(jnp.bfloat16), w_ref[...],
                    preferred_element_type=jnp.float32)
        return y.astype(epi_dtype) + b_ref[...]

    def pool4(y, q):
        # 2x2 max-pool: the 4 window corners are 4 contiguous lane blocks of width q.
        return jnp.maximum(jnp.maximum(y[:, 0:q], y[:, q:2 * q]),
                           jnp.maximum(y[:, 2 * q:3 * q], y[:, 3 * q:4 * q]))

    # conv1 (1->16, 3x3, pad 1) + ReLU + 2x2 max-pool
    y = jnp.maximum(mm_bias(x_ref[...], t1_ref, b1_ref), 0.0)     # (BT, 1024)
    p = pool4(y, 256)                                             # (BT, 256) = NHWC(4,4,16)

    # conv2 (16->32, 3x3, pad 1) + ReLU + 2x2 max-pool
    y = jnp.maximum(mm_bias(p, t2_ref, b2_ref), 0.0)              # (BT, 512)
    p = pool4(y, 128)                                             # (BT, 128) = NHWC(2,2,32)

    # fc1 + ReLU, fc2 + ReLU, fc3 (all padded to lane-dense 128 outputs)
    h = jnp.maximum(mm_bias(p, w1_ref, fb1_ref), 0.0)             # (BT, 128)
    h = jnp.maximum(mm_bias(h, w2_ref, fb2_ref), 0.0)             # (BT, 128)
    o_ref[...] = mm_bias(h, w3_ref, fb3_ref).astype(o_ref.dtype)  # (BT, 128) bf16


# ------------------------- one-time weight preparation ------------------------- #

def _conv_as_matrix(w_oihw, hw, cin):
    """Dense (hw*hw*cin, (hw/2)*(hw/2)*4*cout) matrix for a 3x3 stride-1 SAME conv.

    Built exactly (one weight per nonzero entry) by pushing the identity basis through
    lax.conv.  Output columns are reordered to (hp, wp, ho, wo, c) so the following
    2x2 max-pool is a max over 4 contiguous lane blocks.
    """
    cout = w_oihw.shape[0]
    n_in = hw * hw * cin
    eye = jnp.eye(n_in, dtype=jnp.float32).reshape(n_in, hw, hw, cin)   # (h, w, c) basis
    w_hwio = jnp.transpose(w_oihw, (2, 3, 1, 0))
    y = lax.conv_general_dilated(eye, w_hwio, (1, 1), "SAME",
                                 dimension_numbers=("NHWC", "HWIO", "NHWC"),
                                 precision=lax.Precision.HIGHEST)       # (n_in, hw, hw, cout)
    y = y.reshape(n_in, hw // 2, 2, hw // 2, 2, cout)                   # (i, ho, hp, wo, wp, c)
    y = jnp.transpose(y, (0, 2, 4, 1, 3, 5))                            # (i, hp, wp, ho, wo, c)
    return y.reshape(n_in, (hw // 2) * (hw // 2) * 4 * cout)


def prepare_params(params, epilogue_dtype=None):
    """Fold convs into dense matrices, fold the NCHW flatten into fc1, pad fc layers
    to lane-dense 128 columns, cast matmul operands to bf16 and biases to the
    (chip-dependent) epilogue dtype.  Runs once."""
    if epilogue_dtype is None:
        epilogue_dtype = jnp.bfloat16 if _bf16_epilogue_ok() else jnp.float32
    bf16 = jnp.bfloat16

    t1 = _conv_as_matrix(params["w_conv1"], 8, 1)      # (64, 1024)
    t2 = _conv_as_matrix(params["w_conv2"], 4, 16)     # (256, 512)
    b1 = jnp.tile(params["b_conv1"], 1024 // 16)[None, :].astype(epilogue_dtype)
    b2 = jnp.tile(params["b_conv2"], 512 // 32)[None, :].astype(epilogue_dtype)

    # Kernel's pooled-2 layout is (ho, wo, c); PyTorch's view(-1, 32*2*2) is (c, ho, wo).
    j = jnp.arange(128)
    ho, wo, c = j // 64, (j // 32) % 2, j % 32
    w_fc1_perm = params["w_fc1"][c * 4 + ho * 2 + wo, :]       # (128, 96)

    def pad2(a, rows=128, cols=128):
        r, cc = a.shape
        return jnp.pad(a, ((0, rows - r), (0, cols - cc)))

    def pad1(a, n=128):
        return jnp.pad(a, (0, n - a.shape[0]))[None, :].astype(epilogue_dtype)

    return {
        "t1": t1.astype(bf16), "b1": b1,
        "t2": t2.astype(bf16), "b2": b2,
        "w1": pad2(w_fc1_perm).astype(bf16),        "fb1": pad1(params["b_fc1"]),
        "w2": pad2(params["w_fc2"]).astype(bf16),   "fb2": pad1(params["b_fc2"]),
        "w3": pad2(params["w_fc3"]).astype(bf16),   "fb3": pad1(params["b_fc3"]),
    }


# --------------------------------- forward pass -------------------------------- #

def simple_cnn2d_forward(x_nchw, kp, num_classes):
    B = x_nchw.shape[0]
    assert x_nchw.shape[1:] == (1, 8, 8), "fc1 layout assumes 1x8x8 inputs"
    x2d = x_nchw.reshape(B, 64).astype(jnp.float32)            # (h, w) flattened
    epi_dtype = kp["b1"].dtype                                 # set by prepare_params

    bt, vmem_limit = _pick_batch_block(B, _has_two_tensorcores())
    grid = (pl.cdiv(B, bt),)
    const = lambda i: (0, 0)                                   # weights: DMA'd once

    out = pl.pallas_call(
        functools.partial(_fused_cnn_kernel, epi_dtype=epi_dtype),
        out_shape=jax.ShapeDtypeStruct((B, 128), jnp.bfloat16),
        grid=grid,
        in_specs=[
            pl.BlockSpec((bt, 64), lambda i: (i, 0)),          # x
            pl.BlockSpec((64, 1024), const),                   # conv1 matrix
            pl.BlockSpec((1, 1024), const),                    # conv1 bias
            pl.BlockSpec((256, 512), const),                   # conv2 matrix
            pl.BlockSpec((1, 512), const),                     # conv2 bias
            pl.BlockSpec((128, 128), const),                   # fc1 w
            pl.BlockSpec((1, 128), const),                     # fc1 b
            pl.BlockSpec((128, 128), const),                   # fc2 w
            pl.BlockSpec((1, 128), const),                     # fc2 b
            pl.BlockSpec((128, 128), const),                   # fc3 w
            pl.BlockSpec((1, 128), const),                     # fc3 b
        ],
        out_specs=pl.BlockSpec((bt, 128), lambda i: (i, 0)),
        compiler_params=pltpu.CompilerParams(
            dimension_semantics=("parallel",),                 # megacore sharding on v7x
            vmem_limit_bytes=vmem_limit),
    )(x2d, kp["t1"], kp["b1"], kp["t2"], kp["b2"],
      kp["w1"], kp["fb1"], kp["w2"], kp["fb2"], kp["w3"], kp["fb3"])

    # Drop lane padding; return f32 logits to match the PyTorch module's output dtype.
    return out[:, :num_classes].astype(jnp.float32)


# ------------------------ params & pure-JAX reference -------------------------- #

def init_params(key, num_classes):
    ks = random.split(key, 10)

    def u(k, shape, fan_in):
        bound = 1.0 / jnp.sqrt(float(fan_in))
        return random.uniform(k, shape, jnp.float32, -bound, bound)

    return {
        "w_conv1": u(ks[0], (16, 1, 3, 3), 1 * 9),
        "b_conv1": u(ks[1], (16,), 1 * 9),
        "w_conv2": u(ks[2], (32, 16, 3, 3), 16 * 9),
        "b_conv2": u(ks[3], (32,), 16 * 9),
        "w_fc1":   u(ks[4], (32 * 2 * 2, 96), 32 * 2 * 2),
        "b_fc1":   u(ks[5], (96,), 32 * 2 * 2),
        "w_fc2":   u(ks[6], (96, 32), 96),
        "b_fc2":   u(ks[7], (32,), 96),
        "w_fc3":   u(ks[8], (32, num_classes), 32),
        "b_fc3":   u(ks[9], (num_classes,), 32),
    }


def reference_forward(x_nchw, params):
    """Pure-JAX (XLA, f32 HIGHEST) reference with identical semantics, for validation."""
    x = jnp.transpose(x_nchw, (0, 2, 3, 1)).astype(jnp.float32)

    def conv(x, w, b):
        w_hwio = jnp.transpose(w, (2, 3, 1, 0))
        y = lax.conv_general_dilated(x, w_hwio, (1, 1), "SAME",
                                     dimension_numbers=("NHWC", "HWIO", "NHWC"),
                                     precision=lax.Precision.HIGHEST)
        return jnp.maximum(y + b, 0.0)

    def pool(x):
        return lax.reduce_window(x, -jnp.inf, lax.max,
                                 (1, 2, 2, 1), (1, 2, 2, 1), "VALID")

    x = pool(conv(x, params["w_conv1"], params["b_conv1"]))
    x = pool(conv(x, params["w_conv2"], params["b_conv2"]))
    B = x.shape[0]
    x = jnp.transpose(x, (0, 3, 1, 2)).reshape(B, -1)
    mm = lambda a, w: jnp.dot(a, w, precision=lax.Precision.HIGHEST)
    x = jnp.maximum(mm(x, params["w_fc1"]) + params["b_fc1"], 0.0)
    x = jnp.maximum(mm(x, params["w_fc2"]) + params["b_fc2"], 0.0)
    return mm(x, params["w_fc3"]) + params["b_fc3"]


if __name__ == "__main__":
    num_classes = 10
    key = random.PRNGKey(0)
    kp, kx = random.split(key)
    params = init_params(kp, num_classes)
    prepared = prepare_params(params)

    # 8x8 input -> pool -> 4x4 -> pool -> 2x2, matching fc1's 32*2*2 assumption.
    x = random.normal(kx, (8, 1, 8, 8), jnp.float32)   # NCHW

    fwd = jax.jit(lambda xx, pp: simple_cnn2d_forward(xx, pp, num_classes))
    out = jax.block_until_ready(fwd(x, prepared))
    ref = jax.block_until_ready(reference_forward(x, params))

    assert out.shape == (8, num_classes), out.shape
    # bf16 MXU operands + (on v6e/v7x) bf16 epilogue/output vs f32 HIGHEST reference.
    assert jnp.allclose(out, ref, atol=2e-2, rtol=2e-2), "mismatch vs pure-JAX reference"
    print("KERNEL_OK")
</pallas_src>

<mosaic_0001>
module attributes {stable_mosaic.version = 11 : i64} {
  func.func @_fused_cnn_kernel(%arg0: i32, %arg1: memref<8x64xf32, #tpu.memory_space<vmem>>, %arg2: memref<64x1024xbf16, #tpu.memory_space<vmem>>, %arg3: memref<1x1024xf32, #tpu.memory_space<vmem>>, %arg4: memref<256x512xbf16, #tpu.memory_space<vmem>>, %arg5: memref<1x512xf32, #tpu.memory_space<vmem>>, %arg6: memref<128x128xbf16, #tpu.memory_space<vmem>>, %arg7: memref<1x128xf32, #tpu.memory_space<vmem>>, %arg8: memref<128x128xbf16, #tpu.memory_space<vmem>>, %arg9: memref<1x128xf32, #tpu.memory_space<vmem>>, %arg10: memref<128x128xbf16, #tpu.memory_space<vmem>>, %arg11: memref<1x128xf32, #tpu.memory_space<vmem>>, %arg12: memref<8x128xbf16, #tpu.memory_space<vmem>>) attributes {dimension_semantics = [#tpu.dimension_semantics<parallel>], iteration_bounds = array<i64: 1>, scalar_prefetch = 0 : i64, scratch_operands = 0 : i64, tpu.core_type = #tpu.core_type<tc>, window_params = [{transform_indices = @transform_0, window_bounds = array<i64: 8, 64>}, {pipeline_mode = #tpu.pipeline_mode<synchronous>, transform_indices = @transform_1, window_bounds = array<i64: 64, 1024>}, {pipeline_mode = #tpu.pipeline_mode<synchronous>, transform_indices = @transform_2, window_bounds = array<i64: 1, 1024>}, {pipeline_mode = #tpu.pipeline_mode<synchronous>, transform_indices = @transform_3, window_bounds = array<i64: 256, 512>}, {pipeline_mode = #tpu.pipeline_mode<synchronous>, transform_indices = @transform_4, window_bounds = array<i64: 1, 512>}, {pipeline_mode = #tpu.pipeline_mode<synchronous>, transform_indices = @transform_5, window_bounds = array<i64: 128, 128>}, {pipeline_mode = #tpu.pipeline_mode<synchronous>, transform_indices = @transform_6, window_bounds = array<i64: 1, 128>}, {pipeline_mode = #tpu.pipeline_mode<synchronous>, transform_indices = @transform_7, window_bounds = array<i64: 128, 128>}, {pipeline_mode = #tpu.pipeline_mode<synchronous>, transform_indices = @transform_8, window_bounds = array<i64: 1, 128>}, {pipeline_mode = #tpu.pipeline_mode<synchronous>, transform_indices = @transform_9, window_bounds = array<i64: 128, 128>}, {pipeline_mode = #tpu.pipeline_mode<synchronous>, transform_indices = @transform_10, window_bounds = array<i64: 1, 128>}, {transform_indices = @transform_11, window_bounds = array<i64: 8, 128>}]} {
    %c0 = arith.constant 0 : index
    %c0_0 = arith.constant 0 : index
    %0 = vector.load %arg1[%c0, %c0_0] : memref<8x64xf32, #tpu.memory_space<vmem>>, vector<8x64xf32>
    %1 = arith.truncf %0 : vector<8x64xf32> to vector<8x64xbf16>
    %c0_1 = arith.constant 0 : index
    %c0_2 = arith.constant 0 : index
    %2 = vector.load %arg2[%c0_1, %c0_2] : memref<64x1024xbf16, #tpu.memory_space<vmem>>, vector<64x1024xbf16>
    %cst = arith.constant dense<0.000000e+00> : vector<8x1024xf32>
    %3 = tpu.matmul %1, %2, %cst {dimension_numbers = #tpu.dot_dimension_numbers<[1], [0], [0], [1], [0, 0, 1, 1], [], []>} : vector<8x64xbf16>, vector<64x1024xbf16>, vector<8x1024xf32> -> vector<8x1024xf32>
    %c0_3 = arith.constant 0 : index
    %c0_4 = arith.constant 0 : index
    %4 = vector.load %arg3[%c0_3, %c0_4] : memref<1x1024xf32, #tpu.memory_space<vmem>>, vector<1x1024xf32>
    %5 = vector.broadcast %4 : vector<1x1024xf32> to vector<8x1024xf32>
    %6 = arith.addf %3, %5 : vector<8x1024xf32>
    %cst_5 = arith.constant 0.000000e+00 : f32
    %7 = vector.broadcast %cst_5 : f32 to vector<8x1024xf32>
    %8 = arith.maximumf %6, %7 : vector<8x1024xf32>
    %9 = vector.extract_strided_slice %8 {offsets = [0, 0], sizes = [8, 256], strides = [1, 1]} : vector<8x1024xf32> to vector<8x256xf32>
    %10 = vector.extract_strided_slice %8 {offsets = [0, 256], sizes = [8, 256], strides = [1, 1]} : vector<8x1024xf32> to vector<8x256xf32>
    %11 = arith.maximumf %9, %10 : vector<8x256xf32>
    %12 = vector.extract_strided_slice %8 {offsets = [0, 512], sizes = [8, 256], strides = [1, 1]} : vector<8x1024xf32> to vector<8x256xf32>
    %13 = vector.extract_strided_slice %8 {offsets = [0, 768], sizes = [8, 256], strides = [1, 1]} : vector<8x1024xf32> to vector<8x256xf32>
    %14 = arith.maximumf %12, %13 : vector<8x256xf32>
    %15 = arith.maximumf %11, %14 : vector<8x256xf32>
    %16 = arith.truncf %15 : vector<8x256xf32> to vector<8x256xbf16>
    %c0_6 = arith.constant 0 : index
    %c0_7 = arith.constant 0 : index
    %17 = vector.load %arg4[%c0_6, %c0_7] : memref<256x512xbf16, #tpu.memory_space<vmem>>, vector<256x512xbf16>
    %cst_8 = arith.constant dense<0.000000e+00> : vector<8x512xf32>
    %18 = tpu.matmul %16, %17, %cst_8 {dimension_numbers = #tpu.dot_dimension_numbers<[1], [0], [0], [1], [0, 0, 1, 1], [], []>} : vector<8x256xbf16>, vector<256x512xbf16>, vector<8x512xf32> -> vector<8x512xf32>
    %c0_9 = arith.constant 0 : index
    %c0_10 = arith.constant 0 : index
    %19 = vector.load %arg5[%c0_9, %c0_10] : memref<1x512xf32, #tpu.memory_space<vmem>>, vector<1x512xf32>
    %20 = vector.broadcast %19 : vector<1x512xf32> to vector<8x512xf32>
    %21 = arith.addf %18, %20 : vector<8x512xf32>
    %cst_11 = arith.constant 0.000000e+00 : f32
    %22 = vector.broadcast %cst_11 : f32 to vector<8x512xf32>
    %23 = arith.maximumf %21, %22 : vector<8x512xf32>
    %24 = vector.extract_strided_slice %23 {offsets = [0, 0], sizes = [8, 128], strides = [1, 1]} : vector<8x512xf32> to vector<8x128xf32>
    %25 = vector.extract_strided_slice %23 {offsets = [0, 128], sizes = [8, 128], strides = [1, 1]} : vector<8x512xf32> to vector<8x128xf32>
    %26 = arith.maximumf %24, %25 : vector<8x128xf32>
    %27 = vector.extract_strided_slice %23 {offsets = [0, 256], sizes = [8, 128], strides = [1, 1]} : vector<8x512xf32> to vector<8x128xf32>
    %28 = vector.extract_strided_slice %23 {offsets = [0, 384], sizes = [8, 128], strides = [1, 1]} : vector<8x512xf32> to vector<8x128xf32>
    %29 = arith.maximumf %27, %28 : vector<8x128xf32>
    %30 = arith.maximumf %26, %29 : vector<8x128xf32>
    %31 = arith.truncf %30 : vector<8x128xf32> to vector<8x128xbf16>
    %c0_12 = arith.constant 0 : index
    %c0_13 = arith.constant 0 : index
    %32 = vector.load %arg6[%c0_12, %c0_13] : memref<128x128xbf16, #tpu.memory_space<vmem>>, vector<128x128xbf16>
    %cst_14 = arith.constant dense<0.000000e+00> : vector<8x128xf32>
    %33 = tpu.matmul %31, %32, %cst_14 {dimension_numbers = #tpu.dot_dimension_numbers<[1], [0], [0], [1], [0, 0, 1, 1], [], []>} : vector<8x128xbf16>, vector<128x128xbf16>, vector<8x128xf32> -> vector<8x128xf32>
    %c0_15 = arith.constant 0 : index
    %c0_16 = arith.constant 0 : index
    %34 = vector.load %arg7[%c0_15, %c0_16] : memref<1x128xf32, #tpu.memory_space<vmem>>, vector<1x128xf32>
    %35 = vector.broadcast %34 : vector<1x128xf32> to vector<8x128xf32>
    %36 = arith.addf %33, %35 : vector<8x128xf32>
    %cst_17 = arith.constant 0.000000e+00 : f32
    %37 = vector.broadcast %cst_17 : f32 to vector<8x128xf32>
    %38 = arith.maximumf %36, %37 : vector<8x128xf32>
    %39 = arith.truncf %38 : vector<8x128xf32> to vector<8x128xbf16>
    %c0_18 = arith.constant 0 : index
    %c0_19 = arith.constant 0 : index
    %40 = vector.load %arg8[%c0_18, %c0_19] : memref<128x128xbf16, #tpu.memory_space<vmem>>, vector<128x128xbf16>
    %cst_20 = arith.constant dense<0.000000e+00> : vector<8x128xf32>
    %41 = tpu.matmul %39, %40, %cst_20 {dimension_numbers = #tpu.dot_dimension_numbers<[1], [0], [0], [1], [0, 0, 1, 1], [], []>} : vector<8x128xbf16>, vector<128x128xbf16>, vector<8x128xf32> -> vector<8x128xf32>
    %c0_21 = arith.constant 0 : index
    %c0_22 = arith.constant 0 : index
    %42 = vector.load %arg9[%c0_21, %c0_22] : memref<1x128xf32, #tpu.memory_space<vmem>>, vector<1x128xf32>
    %43 = vector.broadcast %42 : vector<1x128xf32> to vector<8x128xf32>
    %44 = arith.addf %41, %43 : vector<8x128xf32>
    %cst_23 = arith.constant 0.000000e+00 : f32
    %45 = vector.broadcast %cst_23 : f32 to vector<8x128xf32>
    %46 = arith.maximumf %44, %45 : vector<8x128xf32>
    %47 = arith.truncf %46 : vector<8x128xf32> to vector<8x128xbf16>
    %c0_24 = arith.constant 0 : index
    %c0_25 = arith.constant 0 : index
    %48 = vector.load %arg10[%c0_24, %c0_25] : memref<128x128xbf16, #tpu.memory_space<vmem>>, vector<128x128xbf16>
    %cst_26 = arith.constant dense<0.000000e+00> : vector<8x128xf32>
    %49 = tpu.matmul %47, %48, %cst_26 {dimension_numbers = #tpu.dot_dimension_numbers<[1], [0], [0], [1], [0, 0, 1, 1], [], []>} : vector<8x128xbf16>, vector<128x128xbf16>, vector<8x128xf32> -> vector<8x128xf32>
    %c0_27 = arith.constant 0 : index
    %c0_28 = arith.constant 0 : index
    %50 = vector.load %arg11[%c0_27, %c0_28] : memref<1x128xf32, #tpu.memory_space<vmem>>, vector<1x128xf32>
    %51 = vector.broadcast %50 : vector<1x128xf32> to vector<8x128xf32>
    %52 = arith.addf %49, %51 : vector<8x128xf32>
    %53 = arith.truncf %52 : vector<8x128xf32> to vector<8x128xbf16>
    %c0_29 = arith.constant 0 : index
    %c0_30 = arith.constant 0 : index
    %54 = vector.load %arg12[%c0_29, %c0_30] : memref<8x128xbf16, #tpu.memory_space<vmem>>, vector<8x128xbf16>
    tpu.vector_store %arg12[%c0_29, %c0_30], %53 {strides = array<i32>} : memref<8x128xbf16, #tpu.memory_space<vmem>>, vector<8x128xbf16>,
    return
  }
  func.func @transform_0(%arg0: i32) -> (i32, i32) {
    %c0_i32 = arith.constant 0 : i32
    %c0_i32_0 = arith.constant 0 : i32
    return %arg0, %c0_i32 : i32, i32
  }
  func.func @transform_1(%arg0: i32) -> (i32, i32) {
    %c0_i32 = arith.constant 0 : i32
    %c0_i32_0 = arith.constant 0 : i32
    %c0_i32_1 = arith.constant 0 : i32
    return %c0_i32, %c0_i32_0 : i32, i32
  }
  func.func @transform_2(%arg0: i32) -> (i32, i32) {
    %c0_i32 = arith.constant 0 : i32
    %c0_i32_0 = arith.constant 0 : i32
    %c0_i32_1 = arith.constant 0 : i32
    return %c0_i32, %c0_i32_0 : i32, i32
  }
  func.func @transform_3(%arg0: i32) -> (i32, i32) {
    %c0_i32 = arith.constant 0 : i32
    %c0_i32_0 = arith.constant 0 : i32
    %c0_i32_1 = arith.constant 0 : i32
    return %c0_i32, %c0_i32_0 : i32, i32
  }
  func.func @transform_4(%arg0: i32) -> (i32, i32) {
    %c0_i32 = arith.constant 0 : i32
    %c0_i32_0 = arith.constant 0 : i32
    %c0_i32_1 = arith.constant 0 : i32
    return %c0_i32, %c0_i32_0 : i32, i32
  }
  func.func @transform_5(%arg0: i32) -> (i32, i32) {
    %c0_i32 = arith.constant 0 : i32
    %c0_i32_0 = arith.constant 0 : i32
    %c0_i32_1 = arith.constant 0 : i32
    return %c0_i32, %c0_i32_0 : i32, i32
  }
  func.func @transform_6(%arg0: i32) -> (i32, i32) {
    %c0_i32 = arith.constant 0 : i32
    %c0_i32_0 = arith.constant 0 : i32
    %c0_i32_1 = arith.constant 0 : i32
    return %c0_i32, %c0_i32_0 : i32, i32
  }
  func.func @transform_7(%arg0: i32) -> (i32, i32) {
    %c0_i32 = arith.constant 0 : i32
    %c0_i32_0 = arith.constant 0 : i32
    %c0_i32_1 = arith.constant 0 : i32
    return %c0_i32, %c0_i32_0 : i32, i32
  }
  func.func @transform_8(%arg0: i32) -> (i32, i32) {
    %c0_i32 = arith.constant 0 : i32
    %c0_i32_0 = arith.constant 0 : i32
    %c0_i32_1 = arith.constant 0 : i32
    return %c0_i32, %c0_i32_0 : i32, i32
  }
  func.func @transform_9(%arg0: i32) -> (i32, i32) {
    %c0_i32 = arith.constant 0 : i32
    %c0_i32_0 = arith.constant 0 : i32
    %c0_i32_1 = arith.constant 0 : i32
    return %c0_i32, %c0_i32_0 : i32, i32
  }
  func.func @transform_10(%arg0: i32) -> (i32, i32) {
    %c0_i32 = arith.constant 0 : i32
    %c0_i32_0 = arith.constant 0 : i32
    %c0_i32_1 = arith.constant 0 : i32
    return %c0_i32, %c0_i32_0 : i32, i32
  }
  func.func @transform_11(%arg0: i32) -> (i32, i32) {
    %c0_i32 = arith.constant 0 : i32
    %c0_i32_0 = arith.constant 0 : i32
    return %arg0, %c0_i32 : i32, i32
  }
}

</mosaic_0001>

<llo_original>
// kernel: _lambda_.1
$region0: #{_lambda_.1}
  #allocation0 [shape = 'u32[]', space=smem, size = 0x4, offset = 0x4, fixed_abs, tag = 'smem constant byte address 0x4 - core index']
  #allocation1 [shape = 'u32[144,128]{1,0:T(1,128)}', space=vmem, size = 0x12000, scoped, tag = 'internal scratch']
  %s0 = inlined_call_operand.vmem [shape: f32[8,64], index: 0, kind: input, shape index: {}]
  %s1 = inlined_call_operand.hbm [shape: bf16[64,1024], index: 1, kind: input, shape index: {}]
  %s2 = inlined_call_operand.vmem [shape: f32[1,1024], index: 2, kind: input, shape index: {}]
  %s3 = inlined_call_operand.hbm [shape: bf16[256,512], index: 3, kind: input, shape index: {}]
  %s4 = inlined_call_operand.vmem [shape: f32[1,512], index: 4, kind: input, shape index: {}]
  %s5 = inlined_call_operand.vmem [shape: bf16[128,128], index: 5, kind: input, shape index: {}]
  %s6 = inlined_call_operand.vmem [shape: f32[1,128], index: 6, kind: input, shape index: {}]
  %s7 = inlined_call_operand.hbm [shape: bf16[128,128], index: 7, kind: input, shape index: {}]
  %s8 = inlined_call_operand.vmem [shape: f32[1,128], index: 8, kind: input, shape index: {}]
  %s9 = inlined_call_operand.hbm [shape: bf16[128,128], index: 9, kind: input, shape index: {}]
  %s10 = inlined_call_operand.vmem [shape: f32[1,128], index: 10, kind: input, shape index: {}]
  %s11 = inlined_call_operand.vmem [shape: bf16[8,128], index: 11, kind: output, shape index: {}]
  %s12 = sld [smem:[#allocation0]]
  $region70: #{_lambda_.1} parent=0
    _
  %s14 = ssub.s32 1, %s12
  %s15 = scalar_select 0, %s14, %s12
  $region1: #{_lambda_.1} parent=0
    #allocation2 [shape = 'u8[131072]{0}', space=vmem, size = 0x20000, scoped, tag = 'input window, operand 1, single buffered']
    #allocation3 [shape = 's32[1]{0}', space=sflag, size = 0x4, scoped, tag = 'scoped memory for _lambda_.1']
    #allocation4 [shape = 'u8[262144]{0}', space=vmem, size = 0x40000, scoped, tag = 'input window, operand 3, single buffered']
    #allocation5 [shape = 's32[1]{0}', space=sflag, size = 0x4, scoped, tag = 'scoped memory for _lambda_.1']
    #allocation6 [shape = 'u8[32768]{0}', space=vmem, size = 0x8000, scoped, tag = 'input window, operand 7, single buffered']
    #allocation7 [shape = 'u8[32768]{0}', space=vmem, size = 0x8000, scoped, tag = 'input window, operand 9, single buffered']
    #allocation8 [shape = 's32[1]{0}', space=sflag, size = 0x4, scoped, tag = 'scoped memory for _lambda_.1']
    %16 = vsyncpa [#allocation3], 0
    %17 = vsyncpa [#allocation5], 0
    %18 = vsyncpa [#allocation8], 0
    // Predicated region
    $region2: #{_lambda_.1} parent=1 // pred_check
      _
    $region3: #{_lambda_.1} parent=1 // pred_check_branch
      %20 = sbr.rel (0) target = $region5
    $region4: #{_lambda_.1} parent=1 // pred_region
      _
    $region5: #{_lambda_.1} parent=1 // pred_fallthru
      _
    // Predicated region
    $region6: #{_lambda_.1} parent=1 // pred_check
      _
    $region7: #{_lambda_.1} parent=1 // pred_check_branch
      %22 = sbr.rel (0) target = $region9
    $region8: #{_lambda_.1} parent=1 // pred_region
      %s24 = ssub.s32 4096, 4096
      %25 = vsyncadd [#allocation3], %s24
      %s26 = sshll.u32 [#allocation2], 4
      %s27 = int_to_ptr.vmem [resolvable:$true] %s26
      %32 = dma.hbm_to_vmem [thread:$0]  %s1, 4096, %s27, [#allocation3], 512, 512, 32
    $region9: #{_lambda_.1} parent=1 // pred_fallthru
      _
    // Predicated region
    $region10: #{_lambda_.1} parent=1 // pred_check
      _
    $region11: #{_lambda_.1} parent=1 // pred_check_branch
      %34 = sbr.rel (0) target = $region13
    $region12: #{_lambda_.1} parent=1 // pred_region
      _
    $region13: #{_lambda_.1} parent=1 // pred_fallthru
      _
    // Predicated region
    $region14: #{_lambda_.1} parent=1 // pred_check
      _
    $region15: #{_lambda_.1} parent=1 // pred_check_branch
      %36 = sbr.rel (0) target = $region17
    $region16: #{_lambda_.1} parent=1 // pred_region
      %s38 = ssub.s32 8192, 8192
      %39 = vsyncadd [#allocation5], %s38
      %s40 = sshll.u32 [#allocation4], 4
      %s41 = int_to_ptr.vmem [resolvable:$true] %s40
      %46 = dma.hbm_to_vmem [thread:$0]  %s3, 8192, %s41, [#allocation5], 256, 256, 16
    $region17: #{_lambda_.1} parent=1 // pred_fallthru
      _
    // Predicated region
    $region18: #{_lambda_.1} parent=1 // pred_check
      _
    $region19: #{_lambda_.1} parent=1 // pred_check_branch
      %48 = sbr.rel (0) target = $region21
    $region20: #{_lambda_.1} parent=1 // pred_region
      _
    $region21: #{_lambda_.1} parent=1 // pred_fallthru
      _
    // Predicated region
    $region22: #{_lambda_.1} parent=1 // pred_check
      _
    $region23: #{_lambda_.1} parent=1 // pred_check_branch
      %50 = sbr.rel (0) target = $region25
    $region24: #{_lambda_.1} parent=1 // pred_region
      _
    $region25: #{_lambda_.1} parent=1 // pred_fallthru
      _
    // Predicated region
    $region26: #{_lambda_.1} parent=1 // pred_check
      _
    $region27: #{_lambda_.1} parent=1 // pred_check_branch
      %52 = sbr.rel (0) target = $region29
    $region28: #{_lambda_.1} parent=1 // pred_region
      _
    $region29: #{_lambda_.1} parent=1 // pred_fallthru
      _
    // Predicated region
    $region30: #{_lambda_.1} parent=1 // pred_check
      _
    $region31: #{_lambda_.1} parent=1 // pred_check_branch
      %54 = sbr.rel (0) target = $region33
    $region32: #{_lambda_.1} parent=1 // pred_region
      %s56 = ssub.s32 1024, 1024
      %57 = vsyncadd [#allocation5], %s56
      %s58 = sshll.u32 [#allocation6], 4
      %s59 = int_to_ptr.vmem [resolvable:$true] %s58
      %64 = dma.hbm_to_vmem [thread:$0]  %s7, 1024, %s59, [#allocation5], 64, 64, 4
    $region33: #{_lambda_.1} parent=1 // pred_fallthru
      _
    // Predicated region
    $region34: #{_lambda_.1} parent=1 // pred_check
      _
    $region35: #{_lambda_.1} parent=1 // pred_check_branch
      %66 = sbr.rel (0) target = $region37
    $region36: #{_lambda_.1} parent=1 // pred_region
      _
    $region37: #{_lambda_.1} parent=1 // pred_fallthru
      _
    // Predicated region
    $region38: #{_lambda_.1} parent=1 // pred_check
      _
    $region39: #{_lambda_.1} parent=1 // pred_check_branch
      %68 = sbr.rel (0) target = $region41
    $region40: #{_lambda_.1} parent=1 // pred_region
      %s70 = ssub.s32 1024, 1024
      %71 = vsyncadd [#allocation8], %s70
      %s72 = sshll.u32 [#allocation7], 4
      %s73 = int_to_ptr.vmem [resolvable:$true] %s72
      %78 = dma.hbm_to_vmem [thread:$0]  %s9, 1024, %s73, [#allocation8], 64, 64, 4
    $region41: #{_lambda_.1} parent=1 // pred_fallthru
      _
    // Predicated region
    $region42: #{_lambda_.1} parent=1 // pred_check
      _
    $region43: #{_lambda_.1} parent=1 // pred_check_branch
      %80 = sbr.rel (0) target = $region45
    $region44: #{_lambda_.1} parent=1 // pred_region
      _
    $region45: #{_lambda_.1} parent=1 // pred_fallthru
      _
    // Predicated region
    $region46: #{_lambda_.1} parent=1 // pred_check
      _
    $region47: #{_lambda_.1} parent=1 // pred_check_branch
      %82 = sbr.rel (0) target = $region49
    $region48: #{_lambda_.1} parent=1 // pred_region
      %83 = dma.done [#allocation3], 4096
    $region49: #{_lambda_.1} parent=1 // pred_fallthru
      _
    // Predicated region
    $region50: #{_lambda_.1} parent=1 // pred_check
      _
    $region51: #{_lambda_.1} parent=1 // pred_check_branch
      %85 = sbr.rel (0) target = $region53
    $region52: #{_lambda_.1} parent=1 // pred_region
      %86 = dma.done [#allocation5], 8192
    $region53: #{_lambda_.1} parent=1 // pred_fallthru
      _
    // Predicated region
    $region54: #{_lambda_.1} parent=1 // pred_check
      _
    $region55: #{_lambda_.1} parent=1 // pred_check_branch
      %88 = sbr.rel (0) target = $region57
    $region56: #{_lambda_.1} parent=1 // pred_region
      %89 = dma.done [#allocation5], 1024
    $region57: #{_lambda_.1} parent=1 // pred_fallthru
      _
    // Predicated region
    $region58: #{_lambda_.1} parent=1 // pred_check
      _
    $region59: #{_lambda_.1} parent=1 // pred_check_branch
      %91 = sbr.rel (0) target = $region61
    $region60: #{_lambda_.1} parent=1 // pred_region
      %92 = dma.done [#allocation8], 1024
    $region61: #{_lambda_.1} parent=1 // pred_fallthru
      _
    %v94 = vld [vmem:[%s0] sm:$0xff]
    %v95 = vpack.c.bf16 %v94, %v94
    %v96 = vld [vmem:[#allocation2] sm:$0xff]
    %v97 = vld [vmem:[#allocation2 + $0x8] sm:$0xff]
    %v98 = vld [vmem:[#allocation2 + $0x10] sm:$0xff]
    %v99 = vld [vmem:[#allocation2 + $0x18] sm:$0xff]
    %v100 = vld [vmem:[#allocation2 + $0x20] sm:$0xff]
    %v101 = vld [vmem:[#allocation2 + $0x28] sm:$0xff]
    %v102 = vld [vmem:[#allocation2 + $0x30] sm:$0xff]
    %v103 = vld [vmem:[#allocation2 + $0x38] sm:$0xff]
    %v104 = vld [vmem:[#allocation2 + $0x40] sm:$0xff]
    %v105 = vld [vmem:[#allocation2 + $0x48] sm:$0xff]
    %v106 = vld [vmem:[#allocation2 + $0x50] sm:$0xff]
    %v107 = vld [vmem:[#allocation2 + $0x58] sm:$0xff]
    %v108 = vld [vmem:[#allocation2 + $0x60] sm:$0xff]
    %v109 = vld [vmem:[#allocation2 + $0x68] sm:$0xff]
    %v110 = vld [vmem:[#allocation2 + $0x70] sm:$0xff]
    %v111 = vld [vmem:[#allocation2 + $0x78] sm:$0xff]
    %v112 = vld [vmem:[#allocation2 + $0x80] sm:$0xff]
    %v113 = vld [vmem:[#allocation2 + $0x88] sm:$0xff]
    %v114 = vld [vmem:[#allocation2 + $0x90] sm:$0xff]
    %v115 = vld [vmem:[#allocation2 + $0x98] sm:$0xff]
    %v116 = vld [vmem:[#allocation2 + $0xa0] sm:$0xff]
    %v117 = vld [vmem:[#allocation2 + $0xa8] sm:$0xff]
    %v118 = vld [vmem:[#allocation2 + $0xb0] sm:$0xff]
    %v119 = vld [vmem:[#allocation2 + $0xb8] sm:$0xff]
    %v120 = vld [vmem:[#allocation2 + $0xc0] sm:$0xff]
    %v121 = vld [vmem:[#allocation2 + $0xc8] sm:$0xff]
    %v122 = vld [vmem:[#allocation2 + $0xd0] sm:$0xff]
    %v123 = vld [vmem:[#allocation2 + $0xd8] sm:$0xff]
    %v124 = vld [vmem:[#allocation2 + $0xe0] sm:$0xff]
    %v125 = vld [vmem:[#allocation2 + $0xe8] sm:$0xff]
    %v126 = vld [vmem:[#allocation2 + $0xf0] sm:$0xff]
    %v127 = vld [vmem:[#allocation2 + $0xf8] sm:$0xff]
    %v128 = vld [vmem:[%s2] sm:$0xff]
    %v130 = vlaneseq
    %v131 = vshrl.u32 %v130, 7
    %v132 = vsub.s32 0, %v131
    %v133 = vrot.slane %v128, %v132
    %v134 = vlaneseq
    %v135 = vshrl.u32 %v134, 7
    %v136 = vsub.s32 1, %v135
    %v137 = vrot.slane %v128, %v136
    %v138 = vlaneseq
    %v139 = vshrl.u32 %v138, 7
    %v140 = vsub.s32 2, %v139
    %v141 = vrot.slane %v128, %v140
    %v142 = vlaneseq
    %v143 = vshrl.u32 %v142, 7
    %v144 = vsub.s32 3, %v143
    %v145 = vrot.slane %v128, %v144
    %v146 = vlaneseq
    %v147 = vshrl.u32 %v146, 7
    %v148 = vsub.s32 4, %v147
    %v149 = vrot.slane %v128, %v148
    %v150 = vlaneseq
    %v151 = vshrl.u32 %v150, 7
    %v152 = vsub.s32 5, %v151
    %v153 = vrot.slane %v128, %v152
    %v154 = vlaneseq
    %v155 = vshrl.u32 %v154, 7
    %v156 = vsub.s32 6, %v155
    %v157 = vrot.slane %v128, %v156
    %v158 = vlaneseq
    %v159 = vshrl.u32 %v158, 7
    %v160 = vsub.s32 7, %v159
    %v161 = vrot.slane %v128, %v160
    %v202 = vunpack.c.l.b16 %v96
    %v203 = vunpack.c.h.b16 %v96
    %v204 = vunpack.c.l.b16 %v97
    %v205 = vunpack.c.h.b16 %v97
    %v206 = vunpack.c.l.b16 %v98
    %v207 = vunpack.c.h.b16 %v98
    %v208 = vunpack.c.l.b16 %v99
    %v209 = vunpack.c.h.b16 %v99
    %v210 = vunpack.c.l.b16 %v100
    %v211 = vunpack.c.h.b16 %v100
    %v212 = vunpack.c.l.b16 %v101
    %v213 = vunpack.c.h.b16 %v101
    %v214 = vunpack.c.l.b16 %v102
    %v215 = vunpack.c.h.b16 %v102
    %v216 = vunpack.c.l.b16 %v103
    %v217 = vunpack.c.h.b16 %v103
    %v218 = vunpack.c.l.b16 %v104
    %v219 = vunpack.c.h.b16 %v104
    %v220 = vunpack.c.l.b16 %v105
    %v221 = vunpack.c.h.b16 %v105
    %v222 = vunpack.c.l.b16 %v106
    %v223 = vunpack.c.h.b16 %v106
    %v224 = vunpack.c.l.b16 %v107
    %v225 = vunpack.c.h.b16 %v107
    %v226 = vunpack.c.l.b16 %v108
    %v227 = vunpack.c.h.b16 %v108
    %v228 = vunpack.c.l.b16 %v109
    %v229 = vunpack.c.h.b16 %v109
    %v230 = vunpack.c.l.b16 %v110
    %v231 = vunpack.c.h.b16 %v110
    %v232 = vunpack.c.l.b16 %v111
    %v233 = vunpack.c.h.b16 %v111
    %v234 = vunpack.c.l.b16 %v112
    %v235 = vunpack.c.h.b16 %v112
    %v236 = vunpack.c.l.b16 %v113
    %v237 = vunpack.c.h.b16 %v113
    %v238 = vunpack.c.l.b16 %v114
    %v239 = vunpack.c.h.b16 %v114
    %v240 = vunpack.c.l.b16 %v115
    %v241 = vunpack.c.h.b16 %v115
    %v242 = vunpack.c.l.b16 %v116
    %v243 = vunpack.c.h.b16 %v116
    %v244 = vunpack.c.l.b16 %v117
    %v245 = vunpack.c.h.b16 %v117
    %v246 = vunpack.c.l.b16 %v118
    %v247 = vunpack.c.h.b16 %v118
    %v248 = vunpack.c.l.b16 %v119
    %v249 = vunpack.c.h.b16 %v119
    %v250 = vunpack.c.l.b16 %v120
    %v251 = vunpack.c.h.b16 %v120
    %v252 = vunpack.c.l.b16 %v121
    %v253 = vunpack.c.h.b16 %v121
    %v254 = vunpack.c.l.b16 %v122
    %v255 = vunpack.c.h.b16 %v122
    %v256 = vunpack.c.l.b16 %v123
    %v257 = vunpack.c.h.b16 %v123
    %v258 = vunpack.c.l.b16 %v124
    %v259 = vunpack.c.h.b16 %v124
    %v260 = vunpack.c.l.b16 %v125
    %v261 = vunpack.c.h.b16 %v125
    %v262 = vunpack.c.l.b16 %v126
    %v263 = vunpack.c.h.b16 %v126
    %v264 = vunpack.c.l.b16 %v127
    %v265 = vunpack.c.h.b16 %v127
    %v266 = vpack.c.b16 %v210, %v202
    %v267 = vpack.c.b16 %v211, %v203
    %v268 = vpack.c.b16 %v212, %v204
    %v269 = vpack.c.b16 %v213, %v205
    %v270 = vpack.c.b16 %v214, %v206
    %v271 = vpack.c.b16 %v215, %v207
    %v272 = vpack.c.b16 %v216, %v208
    %v273 = vpack.c.b16 %v217, %v209
    %v274 = vpack.c.b16 %v226, %v218
    %v275 = vpack.c.b16 %v227, %v219
    %v276 = vpack.c.b16 %v228, %v220
    %v277 = vpack.c.b16 %v229, %v221
    %v278 = vpack.c.b16 %v230, %v222
    %v279 = vpack.c.b16 %v231, %v223
    %v280 = vpack.c.b16 %v232, %v224
    %v281 = vpack.c.b16 %v233, %v225
    %v282 = vpack.c.b16 %v242, %v234
    %v283 = vpack.c.b16 %v243, %v235
    %v284 = vpack.c.b16 %v244, %v236
    %v285 = vpack.c.b16 %v245, %v237
    %v286 = vpack.c.b16 %v246, %v238
    %v287 = vpack.c.b16 %v247, %v239
    %v288 = vpack.c.b16 %v248, %v240
    %v289 = vpack.c.b16 %v249, %v241
    %v290 = vpack.c.b16 %v258, %v250
    %v291 = vpack.c.b16 %v259, %v251
    %v292 = vpack.c.b16 %v260, %v252
    %v293 = vpack.c.b16 %v261, %v253
    %v294 = vpack.c.b16 %v262, %v254
    %v295 = vpack.c.b16 %v263, %v255
    %v296 = vpack.c.b16 %v264, %v256
    %v297 = vpack.c.b16 %v265, %v257
    %vm330 = vcmask 523264
    %v332 = vsel %vm330, %v95, 0
    %334 = vmatprep.subr.bf16.mxu0 %v267
    %335 = vmatpush1.bf16.msra.mxu0 %v266
    %336 = vmatprep.subr.bf16.mxu0 %v275
    %337 = vmatpush1.bf16.msra.mxu0 %v274
    %338 = vmatprep.subr.bf16.mxu0 %v283
    %339 = vmatpush1.bf16.msra.mxu0 %v282
    %340 = vmatprep.subr.bf16.mxu0 %v291
    %341 = vmatpush1.bf16.msra.mxu0 %v290
    %342 = vmatprep.subr.bf16.mxu0 0
    %343 = vmatpush1.bf16.msra.mxu0 0
    %344 = vmatprep.subr.bf16.mxu0 0
    %345 = vmatpush1.bf16.msra.mxu0 0
    %346 = vmatprep.subr.bf16.mxu0 0
    %347 = vmatpush1.bf16.msra.mxu0 0
    %348 = vmatprep.subr.bf16.mxu0 0
    %349 = vmatpush1.bf16.msra.mxu0 0
    %350 = vmatprep.subr.bf16.mxu0 0
    %351 = vmatpush1.bf16.msra.mxu0 0
    %352 = vmatprep.subr.bf16.mxu0 0
    %353 = vmatpush1.bf16.msra.mxu0 0
    %354 = vmatprep.subr.bf16.mxu0 0
    %355 = vmatpush1.bf16.msra.mxu0 0
    %356 = vmatprep.subr.bf16.mxu0 0
    %357 = vmatpush1.bf16.msra.mxu0 0
    %358 = vmatprep.subr.bf16.mxu0 0
    %359 = vmatpush1.bf16.msra.mxu0 0
    %360 = vmatprep.subr.bf16.mxu0 0
    %361 = vmatpush1.bf16.msra.mxu0 0
    %362 = vmatprep.subr.bf16.mxu0 0
    %363 = vmatpush1.bf16.msra.mxu0 0
    %364 = vmatprep.subr.bf16.mxu0 0
    %365 = vmatpush1.bf16.msra.mxu0 0
    %366 = vmatprep.mubr.bf16.mxu0 0
    %367 = vmatmul.mubr.bf16.gmra.mrb[0].mxu0 %v332
    %v368 = vpop.f32.mrb[0].mxu0
    %v369 = vadd.f32 %v133, %v368
    %v370 = vpop.f32.mrb[0].mxu0
    %v371 = vadd.f32 %v137, %v370
    %v372 = vpop.f32.mrb[0].mxu0
    %v373 = vpop.f32.mrb[0].mxu0
    %374 = vdwg.mxu0
    %375 = vmatprep.subr.bf16.mxu0 %v269
    %376 = vmatpush1.bf16.msra.mxu0 %v268
    %377 = vmatprep.subr.bf16.mxu0 %v277
    %378 = vmatpush1.bf16.msra.mxu0 %v276
    %379 = vmatprep.subr.bf16.mxu0 %v285
    %380 = vmatpush1.bf16.msra.mxu0 %v284
    %381 = vmatprep.subr.bf16.mxu0 %v293
    %382 = vmatpush1.bf16.msra.mxu0 %v292
    %383 = vmatprep.subr.bf16.mxu0 0
    %384 = vmatpush1.bf16.msra.mxu0 0
    %385 = vmatprep.subr.bf16.mxu0 0
    %386 = vmatpush1.bf16.msra.mxu0 0
    %387 = vmatprep.subr.bf16.mxu0 0
    %388 = vmatpush1.bf16.msra.mxu0 0
    %389 = vmatprep.subr.bf16.mxu0 0
    %390 = vmatpush1.bf16.msra.mxu0 0
    %391 = vmatprep.subr.bf16.mxu0 0
    %392 = vmatpush1.bf16.msra.mxu0 0
    %393 = vmatprep.subr.bf16.mxu0 0
    %394 = vmatpush1.bf16.msra.mxu0 0
    %395 = vmatprep.subr.bf16.mxu0 0
    %396 = vmatpush1.bf16.msra.mxu0 0
    %397 = vmatprep.subr.bf16.mxu0 0
    %398 = vmatpush1.bf16.msra.mxu0 0
    %399 = vmatprep.subr.bf16.mxu0 0
    %400 = vmatpush1.bf16.msra.mxu0 0
    %401 = vmatprep.subr.bf16.mxu0 0
    %402 = vmatpush1.bf16.msra.mxu0 0
    %403 = vmatprep.subr.bf16.mxu0 0
    %404 = vmatpush1.bf16.msra.mxu0 0
    %405 = vmatprep.subr.bf16.mxu0 0
    %406 = vmatpush1.bf16.msra.mxu0 0
    %407 = vmatprep.mubr.bf16.mxu0 0
    %408 = vmatmul.mubr.bf16.gmra.mrb[0].mxu0 %v332
    %v409 = vpop.f32.mrb[0].mxu0
    %v410 = vadd.f32 %v141, %v409
    %v411 = vpop.f32.mrb[0].mxu0
    %v412 = vadd.f32 %v145, %v411
    %v413 = vpop.f32.mrb[0].mxu0
    %v414 = vpop.f32.mrb[0].mxu0
    %415 = vdwg.mxu0
    %416 = vmatprep.subr.bf16.mxu0 %v271
    %417 = vmatpush1.bf16.msra.mxu0 %v270
    %418 = vmatprep.subr.bf16.mxu0 %v279
    %419 = vmatpush1.bf16.msra.mxu0 %v278
    %420 = vmatprep.subr.bf16.mxu0 %v287
    %421 = vmatpush1.bf16.msra.mxu0 %v286
    %422 = vmatprep.subr.bf16.mxu0 %v295
    %423 = vmatpush1.bf16.msra.mxu0 %v294
    %424 = vmatprep.subr.bf16.mxu0 0
    %425 = vmatpush1.bf16.msra.mxu0 0
    %426 = vmatprep.subr.bf16.mxu0 0
    %427 = vmatpush1.bf16.msra.mxu0 0
    %428 = vmatprep.subr.bf16.mxu0 0
    %429 = vmatpush1.bf16.msra.mxu0 0
    %430 = vmatprep.subr.bf16.mxu0 0
    %431 = vmatpush1.bf16.msra.mxu0 0
    %432 = vmatprep.subr.bf16.mxu0 0
    %433 = vmatpush1.bf16.msra.mxu0 0
    %434 = vmatprep.subr.bf16.mxu0 0
    %435 = vmatpush1.bf16.msra.mxu0 0
    %436 = vmatprep.subr.bf16.mxu0 0
    %437 = vmatpush1.bf16.msra.mxu0 0
    %438 = vmatprep.subr.bf16.mxu0 0
    %439 = vmatpush1.bf16.msra.mxu0 0
    %440 = vmatprep.subr.bf16.mxu0 0
    %441 = vmatpush1.bf16.msra.mxu0 0
    %442 = vmatprep.subr.bf16.mxu0 0
    %443 = vmatpush1.bf16.msra.mxu0 0
    %444 = vmatprep.subr.bf16.mxu0 0
    %445 = vmatpush1.bf16.msra.mxu0 0
    %446 = vmatprep.subr.bf16.mxu0 0
    %447 = vmatpush1.bf16.msra.mxu0 0
    %448 = vmatprep.mubr.bf16.mxu0 0
    %449 = vmatmul.mubr.bf16.gmra.mrb[0].mxu0 %v332
    %v450 = vpop.f32.mrb[0].mxu0
    %v451 = vadd.f32 %v149, %v450
    %v452 = vpop.f32.mrb[0].mxu0
    %v453 = vadd.f32 %v153, %v452
    %v454 = vpop.f32.mrb[0].mxu0
    %v455 = vpop.f32.mrb[0].mxu0
    %456 = vdwg.mxu0
    %457 = vmatprep.subr.bf16.mxu0 %v273
    %458 = vmatpush1.bf16.msra.mxu0 %v272
    %459 = vmatprep.subr.bf16.mxu0 %v281
    %460 = vmatpush1.bf16.msra.mxu0 %v280
    %461 = vmatprep.subr.bf16.mxu0 %v289
    %462 = vmatpush1.bf16.msra.mxu0 %v288
    %463 = vmatprep.subr.bf16.mxu0 %v297
    %464 = vmatpush1.bf16.msra.mxu0 %v296
    %465 = vmatprep.subr.bf16.mxu0 0
    %466 = vmatpush1.bf16.msra.mxu0 0
    %467 = vmatprep.subr.bf16.mxu0 0
    %468 = vmatpush1.bf16.msra.mxu0 0
    %469 = vmatprep.subr.bf16.mxu0 0
    %470 = vmatpush1.bf16.msra.mxu0 0
    %471 = vmatprep.subr.bf16.mxu0 0
    %472 = vmatpush1.bf16.msra.mxu0 0
    %473 = vmatprep.subr.bf16.mxu0 0
    %474 = vmatpush1.bf16.msra.mxu0 0
    %475 = vmatprep.subr.bf16.mxu0 0
    %476 = vmatpush1.bf16.msra.mxu0 0
    %477 = vmatprep.subr.bf16.mxu0 0
    %478 = vmatpush1.bf16.msra.mxu0 0
    %479 = vmatprep.subr.bf16.mxu0 0
    %480 = vmatpush1.bf16.msra.mxu0 0
    %481 = vmatprep.subr.bf16.mxu0 0
    %482 = vmatpush1.bf16.msra.mxu0 0
    %483 = vmatprep.subr.bf16.mxu0 0
    %484 = vmatpush1.bf16.msra.mxu0 0
    %485 = vmatprep.subr.bf16.mxu0 0
    %486 = vmatpush1.bf16.msra.mxu0 0
    %487 = vmatprep.subr.bf16.mxu0 0
    %488 = vmatpush1.bf16.msra.mxu0 0
    %489 = vmatprep.mubr.bf16.mxu0 0
    %490 = vmatmul.mubr.bf16.gmra.mrb[0].mxu0 %v332
    %v491 = vpop.f32.mrb[0].mxu0
    %v492 = vadd.f32 %v157, %v491
    %v493 = vpop.f32.mrb[0].mxu0
    %v494 = vadd.f32 %v161, %v493
    %v495 = vpop.f32.mrb[0].mxu0
    %v496 = vpop.f32.mrb[0].mxu0
    %497 = vdwg.mxu0
    %v498 = vmax.f32 %v369, 0.0
    %v499 = vmax.f32 %v371, 0.0
    %v500 = vmax.f32 %v410, 0.0
    %v501 = vmax.f32 %v412, 0.0
    %v502 = vmax.f32 %v451, 0.0
    %v503 = vmax.f32 %v453, 0.0
    %v504 = vmax.f32 %v492, 0.0
    %v505 = vmax.f32 %v494, 0.0
    %v506 = vmax.f32 %v498, %v500
    %v507 = vmax.f32 %v499, %v501
    %v508 = vmax.f32 %v502, %v504
    %v509 = vmax.f32 %v503, %v505
    %v510 = vmax.f32 %v506, %v508
    %v511 = vmax.f32 %v507, %v509
    %v512 = vpack.c.bf16 %v510, %v510
    %v513 = vpack.c.bf16 %v511, %v511
    %v514 = vld [vmem:[#allocation4] sm:$0xff]
    %v515 = vld [vmem:[#allocation4 + $0x8] sm:$0xff]
    %v516 = vld [vmem:[#allocation4 + $0x10] sm:$0xff]
    %v517 = vld [vmem:[#allocation4 + $0x18] sm:$0xff]
    %v518 = vld [vmem:[#allocation4 + $0x20] sm:$0xff]
    %v519 = vld [vmem:[#allocation4 + $0x28] sm:$0xff]
    %v520 = vld [vmem:[#allocation4 + $0x30] sm:$0xff]
    %v521 = vld [vmem:[#allocation4 + $0x38] sm:$0xff]
    %v522 = vld [vmem:[#allocation4 + $0x40] sm:$0xff]
    %v523 = vld [vmem:[#allocation4 + $0x48] sm:$0xff]
    %v524 = vld [vmem:[#allocation4 + $0x50] sm:$0xff]
    %v525 = vld [vmem:[#allocation4 + $0x58] sm:$0xff]
    %v526 = vld [vmem:[#allocation4 + $0x60] sm:$0xff]
    %v527 = vld [vmem:[#allocation4 + $0x68] sm:$0xff]
    %v528 = vld [vmem:[#allocation4 + $0x70] sm:$0xff]
    %v529 = vld [vmem:[#allocation4 + $0x78] sm:$0xff]
    %v530 = vld [vmem:[#allocation4 + $0x80] sm:$0xff]
    %v531 = vld [vmem:[#allocation4 + $0x88] sm:$0xff]
    %v532 = vld [vmem:[#allocation4 + $0x90] sm:$0xff]
    %v533 = vld [vmem:[#allocation4 + $0x98] sm:$0xff]
    %v534 = vld [vmem:[#allocation4 + $0xa0] sm:$0xff]
    %v535 = vld [vmem:[#allocation4 + $0xa8] sm:$0xff]
    %v536 = vld [vmem:[#allocation4 + $0xb0] sm:$0xff]
    %v537 = vld [vmem:[#allocation4 + $0xb8] sm:$0xff]
    %v538 = vld [vmem:[#allocation4 + $0xc0] sm:$0xff]
    %v539 = vld [vmem:[#allocation4 + $0xc8] sm:$0xff]
    %v540 = vld [vmem:[#allocation4 + $0xd0] sm:$0xff]
    %v541 = vld [vmem:[#allocation4 + $0xd8] sm:$0xff]
    %v542 = vld [vmem:[#allocation4 + $0xe0] sm:$0xff]
    %v543 = vld [vmem:[#allocation4 + $0xe8] sm:$0xff]
    %v544 = vld [vmem:[#allocation4 + $0xf0] sm:$0xff]
    %v545 = vld [vmem:[#allocation4 + $0xf8] sm:$0xff]
    %v546 = vld [vmem:[#allocation4 + $0x100] sm:$0xff]
    %v547 = vld [vmem:[#allocation4 + $0x108] sm:$0xff]
    %v548 = vld [vmem:[#allocation4 + $0x110] sm:$0xff]
    %v549 = vld [vmem:[#allocation4 + $0x118] sm:$0xff]
    %v550 = vld [vmem:[#allocation4 + $0x120] sm:$0xff]
    %v551 = vld [vmem:[#allocation4 + $0x128] sm:$0xff]
    %v552 = vld [vmem:[#allocation4 + $0x130] sm:$0xff]
    %v553 = vld [vmem:[#allocation4 + $0x138] sm:$0xff]
    %v554 = vld [vmem:[#allocation4 + $0x140] sm:$0xff]
    %v555 = vld [vmem:[#allocation4 + $0x148] sm:$0xff]
    %v556 = vld [vmem:[#allocation4 + $0x150] sm:$0xff]
    %v557 = vld [vmem:[#allocation4 + $0x158] sm:$0xff]
    %v558 = vld [vmem:[#allocation4 + $0x160] sm:$0xff]
    %v559 = vld [vmem:[#allocation4 + $0x168] sm:$0xff]
    %v560 = vld [vmem:[#allocation4 + $0x170] sm:$0xff]
    %v561 = vld [vmem:[#allocation4 + $0x178] sm:$0xff]
    %v562 = vld [vmem:[#allocation4 + $0x180] sm:$0xff]
    %v563 = vld [vmem:[#allocation4 + $0x188] sm:$0xff]
    %v564 = vld [vmem:[#allocation4 + $0x190] sm:$0xff]
    %v565 = vld [vmem:[#allocation4 + $0x198] sm:$0xff]
    %v566 = vld [vmem:[#allocation4 + $0x1a0] sm:$0xff]
    %v567 = vld [vmem:[#allocation4 + $0x1a8] sm:$0xff]
    %v568 = vld [vmem:[#allocation4 + $0x1b0] sm:$0xff]
    %v569 = vld [vmem:[#allocation4 + $0x1b8] sm:$0xff]
    %v570 = vld [vmem:[#allocation4 + $0x1c0] sm:$0xff]
    %v571 = vld [vmem:[#allocation4 + $0x1c8] sm:$0xff]
    %v572 = vld [vmem:[#allocation4 + $0x1d0] sm:$0xff]
    %v573 = vld [vmem:[#allocation4 + $0x1d8] sm:$0xff]
    %v574 = vld [vmem:[#allocation4 + $0x1e0] sm:$0xff]
    %v575 = vld [vmem:[#allocation4 + $0x1e8] sm:$0xff]
    %v576 = vld [vmem:[#allocation4 + $0x1f0] sm:$0xff]
    %v577 = vld [vmem:[#allocation4 + $0x1f8] sm:$0xff]
    %v578 = vld [vmem:[%s4] sm:$0xf]
    %v580 = vlaneseq
    %v581 = vshrl.u32 %v580, 7
    %v582 = vsub.s32 0, %v581
    %v583 = vrot.slane %v578, %v582
    %v584 = vlaneseq
    %v585 = vshrl.u32 %v584, 7
    %v586 = vsub.s32 1, %v585
    %v587 = vrot.slane %v578, %v586
    %v588 = vlaneseq
    %v589 = vshrl.u32 %v588, 7
    %v590 = vsub.s32 2, %v589
    %v591 = vrot.slane %v578, %v590
    %v592 = vlaneseq
    %v593 = vshrl.u32 %v592, 7
    %v594 = vsub.s32 3, %v593
    %v595 = vrot.slane %v578, %v594
    %v664 = vunpack.c.l.b16 %v514
    %v665 = vunpack.c.h.b16 %v514
    %v666 = vunpack.c.l.b16 %v515
    %v667 = vunpack.c.h.b16 %v515
    %v668 = vunpack.c.l.b16 %v516
    %v669 = vunpack.c.h.b16 %v516
    %v670 = vunpack.c.l.b16 %v517
    %v671 = vunpack.c.h.b16 %v517
    %v672 = vunpack.c.l.b16 %v518
    %v673 = vunpack.c.h.b16 %v518
    %v674 = vunpack.c.l.b16 %v519
    %v675 = vunpack.c.h.b16 %v519
    %v676 = vunpack.c.l.b16 %v520
    %v677 = vunpack.c.h.b16 %v520
    %v678 = vunpack.c.l.b16 %v521
    %v679 = vunpack.c.h.b16 %v521
    %v680 = vunpack.c.l.b16 %v522
    %v681 = vunpack.c.h.b16 %v522
    %v682 = vunpack.c.l.b16 %v523
    %v683 = vunpack.c.h.b16 %v523
    %v684 = vunpack.c.l.b16 %v524
    %v685 = vunpack.c.h.b16 %v524
    %v686 = vunpack.c.l.b16 %v525
    %v687 = vunpack.c.h.b16 %v525
    %v688 = vunpack.c.l.b16 %v526
    %v689 = vunpack.c.h.b16 %v526
    %v690 = vunpack.c.l.b16 %v527
    %v691 = vunpack.c.h.b16 %v527
    %v692 = vunpack.c.l.b16 %v528
    %v693 = vunpack.c.h.b16 %v528
    %v694 = vunpack.c.l.b16 %v529
    %v695 = vunpack.c.h.b16 %v529
    %v696 = vunpack.c.l.b16 %v530
    %v697 = vunpack.c.h.b16 %v530
    %v698 = vunpack.c.l.b16 %v531
    %v699 = vunpack.c.h.b16 %v531
    %v700 = vunpack.c.l.b16 %v532
    %v701 = vunpack.c.h.b16 %v532
    %v702 = vunpack.c.l.b16 %v533
    %v703 = vunpack.c.h.b16 %v533
    %v704 = vunpack.c.l.b16 %v534
    %v705 = vunpack.c.h.b16 %v534
    %v706 = vunpack.c.l.b16 %v535
    %v707 = vunpack.c.h.b16 %v535
    %v708 = vunpack.c.l.b16 %v536
    %v709 = vunpack.c.h.b16 %v536
    %v710 = vunpack.c.l.b16 %v537
    %v711 = vunpack.c.h.b16 %v537
    %v712 = vunpack.c.l.b16 %v538
    %v713 = vunpack.c.h.b16 %v538
    %v714 = vunpack.c.l.b16 %v539
    %v715 = vunpack.c.h.b16 %v539
    %v716 = vunpack.c.l.b16 %v540
    %v717 = vunpack.c.h.b16 %v540
    %v718 = vunpack.c.l.b16 %v541
    %v719 = vunpack.c.h.b16 %v541
    %v720 = vunpack.c.l.b16 %v542
    %v721 = vunpack.c.h.b16 %v542
    %v722 = vunpack.c.l.b16 %v543
    %v723 = vunpack.c.h.b16 %v543
    %v724 = vunpack.c.l.b16 %v544
    %v725 = vunpack.c.h.b16 %v544
    %v726 = vunpack.c.l.b16 %v545
    %v727 = vunpack.c.h.b16 %v545
    %v728 = vunpack.c.l.b16 %v546
    %v729 = vunpack.c.h.b16 %v546
    %v730 = vunpack.c.l.b16 %v547
    %v731 = vunpack.c.h.b16 %v547
    %v732 = vunpack.c.l.b16 %v548
    %v733 = vunpack.c.h.b16 %v548
    %v734 = vunpack.c.l.b16 %v549
    %v735 = vunpack.c.h.b16 %v549
    %v736 = vunpack.c.l.b16 %v550
    %v737 = vunpack.c.h.b16 %v550
    %v738 = vunpack.c.l.b16 %v551
    %v739 = vunpack.c.h.b16 %v551
    %v740 = vunpack.c.l.b16 %v552
    %v741 = vunpack.c.h.b16 %v552
    %v742 = vunpack.c.l.b16 %v553
    %v743 = vunpack.c.h.b16 %v553
    %v744 = vunpack.c.l.b16 %v554
    %v745 = vunpack.c.h.b16 %v554
    %v746 = vunpack.c.l.b16 %v555
    %v747 = vunpack.c.h.b16 %v555
    %v748 = vunpack.c.l.b16 %v556
    %v749 = vunpack.c.h.b16 %v556
    %v750 = vunpack.c.l.b16 %v557
    %v751 = vunpack.c.h.b16 %v557
    %v752 = vunpack.c.l.b16 %v558
    %v753 = vunpack.c.h.b16 %v558
    %v754 = vunpack.c.l.b16 %v559
    %v755 = vunpack.c.h.b16 %v559
    %v756 = vunpack.c.l.b16 %v560
    %v757 = vunpack.c.h.b16 %v560
    %v758 = vunpack.c.l.b16 %v561
    %v759 = vunpack.c.h.b16 %v561
    %v760 = vunpack.c.l.b16 %v562
    %v761 = vunpack.c.h.b16 %v562
    %v762 = vunpack.c.l.b16 %v563
    %v763 = vunpack.c.h.b16 %v563
    %v764 = vunpack.c.l.b16 %v564
    %v765 = vunpack.c.h.b16 %v564
    %v766 = vunpack.c.l.b16 %v565
    %v767 = vunpack.c.h.b16 %v565
    %v768 = vunpack.c.l.b16 %v566
    %v769 = vunpack.c.h.b16 %v566
    %v770 = vunpack.c.l.b16 %v567
    %v771 = vunpack.c.h.b16 %v567
    %v772 = vunpack.c.l.b16 %v568
    %v773 = vunpack.c.h.b16 %v568
    %v774 = vunpack.c.l.b16 %v569
    %v775 = vunpack.c.h.b16 %v569
    %v776 = vunpack.c.l.b16 %v570
    %v777 = vunpack.c.h.b16 %v570
    %v778 = vunpack.c.l.b16 %v571
    %v779 = vunpack.c.h.b16 %v571
    %v780 = vunpack.c.l.b16 %v572
    %v781 = vunpack.c.h.b16 %v572
    %v782 = vunpack.c.l.b16 %v573
    %v783 = vunpack.c.h.b16 %v573
    %v784 = vunpack.c.l.b16 %v574
    %v785 = vunpack.c.h.b16 %v574
    %v786 = vunpack.c.l.b16 %v575
    %v787 = vunpack.c.h.b16 %v575
    %v788 = vunpack.c.l.b16 %v576
    %v789 = vunpack.c.h.b16 %v576
    %v790 = vunpack.c.l.b16 %v577
    %v791 = vunpack.c.h.b16 %v577
    %v792 = vpack.c.b16 %v668, %v664
    %v793 = vpack.c.b16 %v669, %v665
    %v794 = vpack.c.b16 %v670, %v666
    %v795 = vpack.c.b16 %v671, %v667
    %v796 = vpack.c.b16 %v676, %v672
    %v797 = vpack.c.b16 %v677, %v673
    %v798 = vpack.c.b16 %v678, %v674
    %v799 = vpack.c.b16 %v679, %v675
    %v800 = vpack.c.b16 %v684, %v680
    %v801 = vpack.c.b16 %v685, %v681
    %v802 = vpack.c.b16 %v686, %v682
    %v803 = vpack.c.b16 %v687, %v683
    %v804 = vpack.c.b16 %v692, %v688
    %v805 = vpack.c.b16 %v693, %v689
    %v806 = vpack.c.b16 %v694, %v690
    %v807 = vpack.c.b16 %v695, %v691
    %v808 = vpack.c.b16 %v700, %v696
    %v809 = vpack.c.b16 %v701, %v697
    %v810 = vpack.c.b16 %v702, %v698
    %v811 = vpack.c.b16 %v703, %v699
    %v812 = vpack.c.b16 %v708, %v704
    %v813 = vpack.c.b16 %v709, %v705
    %v814 = vpack.c.b16 %v710, %v706
    %v815 = vpack.c.b16 %v711, %v707
    %v816 = vpack.c.b16 %v716, %v712
    %v817 = vpack.c.b16 %v717, %v713
    %v818 = vpack.c.b16 %v718, %v714
    %v819 = vpack.c.b16 %v719, %v715
    %v820 = vpack.c.b16 %v724, %v720
    %v821 = vpack.c.b16 %v725, %v721
    %v822 = vpack.c.b16 %v726, %v722
    %v823 = vpack.c.b16 %v727, %v723
    %v824 = vpack.c.b16 %v732, %v728
    %v825 = vpack.c.b16 %v733, %v729
    %v826 = vpack.c.b16 %v734, %v730
    %v827 = vpack.c.b16 %v735, %v731
    %v828 = vpack.c.b16 %v740, %v736
    %v829 = vpack.c.b16 %v741, %v737
    %v830 = vpack.c.b16 %v742, %v738
    %v831 = vpack.c.b16 %v743, %v739
    %v832 = vpack.c.b16 %v748, %v744
    %v833 = vpack.c.b16 %v749, %v745
    %v834 = vpack.c.b16 %v750, %v746
    %v835 = vpack.c.b16 %v751, %v747
    %v836 = vpack.c.b16 %v756, %v752
    %v837 = vpack.c.b16 %v757, %v753
    %v838 = vpack.c.b16 %v758, %v754
    %v839 = vpack.c.b16 %v759, %v755
    %v840 = vpack.c.b16 %v764, %v760
    %v841 = vpack.c.b16 %v765, %v761
    %v842 = vpack.c.b16 %v766, %v762
    %v843 = vpack.c.b16 %v767, %v763
    %v844 = vpack.c.b16 %v772, %v768
    %v845 = vpack.c.b16 %v773, %v769
    %v846 = vpack.c.b16 %v774, %v770
    %v847 = vpack.c.b16 %v775, %v771
    %v848 = vpack.c.b16 %v780, %v776
    %v849 = vpack.c.b16 %v781, %v777
    %v850 = vpack.c.b16 %v782, %v778
    %v851 = vpack.c.b16 %v783, %v779
    %v852 = vpack.c.b16 %v788, %v784
    %v853 = vpack.c.b16 %v789, %v785
    %v854 = vpack.c.b16 %v790, %v786
    %v855 = vpack.c.b16 %v791, %v787
    %920 = vmatprep.subr.bf16.mxu0 %v793
    %921 = vmatpush1.bf16.msra.mxu0 %v792
    %922 = vmatprep.subr.bf16.mxu0 %v797
    %923 = vmatpush1.bf16.msra.mxu0 %v796
    %924 = vmatprep.subr.bf16.mxu0 %v801
    %925 = vmatpush1.bf16.msra.mxu0 %v800
    %926 = vmatprep.subr.bf16.mxu0 %v805
    %927 = vmatpush1.bf16.msra.mxu0 %v804
    %928 = vmatprep.subr.bf16.mxu0 %v809
    %929 = vmatpush1.bf16.msra.mxu0 %v808
    %930 = vmatprep.subr.bf16.mxu0 %v813
    %931 = vmatpush1.bf16.msra.mxu0 %v812
    %932 = vmatprep.subr.bf16.mxu0 %v817
    %933 = vmatpush1.bf16.msra.mxu0 %v816
    %934 = vmatprep.subr.bf16.mxu0 %v821
    %935 = vmatpush1.bf16.msra.mxu0 %v820
    %936 = vmatprep.subr.bf16.mxu0 %v825
    %937 = vmatpush1.bf16.msra.mxu0 %v824
    %938 = vmatprep.subr.bf16.mxu0 %v829
    %939 = vmatpush1.bf16.msra.mxu0 %v828
    %940 = vmatprep.subr.bf16.mxu0 %v833
    %941 = vmatpush1.bf16.msra.mxu0 %v832
    %942 = vmatprep.subr.bf16.mxu0 %v837
    %943 = vmatpush1.bf16.msra.mxu0 %v836
    %944 = vmatprep.subr.bf16.mxu0 %v841
    %945 = vmatpush1.bf16.msra.mxu0 %v840
    %946 = vmatprep.subr.bf16.mxu0 %v845
    %947 = vmatpush1.bf16.msra.mxu0 %v844
    %948 = vmatprep.subr.bf16.mxu0 %v849
    %949 = vmatpush1.bf16.msra.mxu0 %v848
    %950 = vmatprep.subr.bf16.mxu0 %v853
    %951 = vmatpush1.bf16.msra.mxu0 %v852
    %952 = vmatprep.mubr.bf16.mxu0 %v513
    %953 = vmatmul.mubr.bf16.gmra.mrb[0].mxu0 %v512
    %v954 = vpop.f32.mrb[0].mxu0
    %v955 = vadd.f32 %v583, %v954
    %v956 = vpop.f32.mrb[0].mxu0
    %v957 = vadd.f32 %v587, %v956
    %v958 = vpop.f32.mrb[0].mxu0
    %v959 = vpop.f32.mrb[0].mxu0
    %960 = vdwg.mxu0
    %961 = vmatprep.subr.bf16.mxu0 %v795
    %962 = vmatpush1.bf16.msra.mxu0 %v794
    %963 = vmatprep.subr.bf16.mxu0 %v799
    %964 = vmatpush1.bf16.msra.mxu0 %v798
    %965 = vmatprep.subr.bf16.mxu0 %v803
    %966 = vmatpush1.bf16.msra.mxu0 %v802
    %967 = vmatprep.subr.bf16.mxu0 %v807
    %968 = vmatpush1.bf16.msra.mxu0 %v806
    %969 = vmatprep.subr.bf16.mxu0 %v811
    %970 = vmatpush1.bf16.msra.mxu0 %v810
    %971 = vmatprep.subr.bf16.mxu0 %v815
    %972 = vmatpush1.bf16.msra.mxu0 %v814
    %973 = vmatprep.subr.bf16.mxu0 %v819
    %974 = vmatpush1.bf16.msra.mxu0 %v818
    %975 = vmatprep.subr.bf16.mxu0 %v823
    %976 = vmatpush1.bf16.msra.mxu0 %v822
    %977 = vmatprep.subr.bf16.mxu0 %v827
    %978 = vmatpush1.bf16.msra.mxu0 %v826
    %979 = vmatprep.subr.bf16.mxu0 %v831
    %980 = vmatpush1.bf16.msra.mxu0 %v830
    %981 = vmatprep.subr.bf16.mxu0 %v835
    %982 = vmatpush1.bf16.msra.mxu0 %v834
    %983 = vmatprep.subr.bf16.mxu0 %v839
    %984 = vmatpush1.bf16.msra.mxu0 %v838
    %985 = vmatprep.subr.bf16.mxu0 %v843
    %986 = vmatpush1.bf16.msra.mxu0 %v842
    %987 = vmatprep.subr.bf16.mxu0 %v847
    %988 = vmatpush1.bf16.msra.mxu0 %v846
    %989 = vmatprep.subr.bf16.mxu0 %v851
    %990 = vmatpush1.bf16.msra.mxu0 %v850
    %991 = vmatprep.subr.bf16.mxu0 %v855
    %992 = vmatpush1.bf16.msra.mxu0 %v854
    %993 = vmatprep.mubr.bf16.mxu0 %v513
    %994 = vmatmul.mubr.bf16.gmra.mrb[0].mxu0 %v512
    %v995 = vpop.f32.mrb[0].mxu0
    %v996 = vadd.f32 %v591, %v995
    %v997 = vpop.f32.mrb[0].mxu0
    %v998 = vadd.f32 %v595, %v997
    %v999 = vpop.f32.mrb[0].mxu0
    %v1000 = vpop.f32.mrb[0].mxu0
    %1001 = vdwg.mxu0
    %v1002 = vmax.f32 %v955, 0.0
    %v1003 = vmax.f32 %v957, 0.0
    %v1004 = vmax.f32 %v996, 0.0
    %v1005 = vmax.f32 %v998, 0.0
    %v1006 = vmax.f32 %v1002, %v1003
    %v1007 = vmax.f32 %v1004, %v1005
    %v1008 = vmax.f32 %v1006, %v1007
    %v1009 = vpack.c.bf16 %v1008, %v1008
    %v1010 = vld [vmem:[%s5] sm:$0xf]
    %v1011 = vld [vmem:[%s5 + $0x4] sm:$0xf]
    %v1012 = vld [vmem:[%s5 + $0x8] sm:$0xf]
    %v1013 = vld [vmem:[%s5 + $0xc] sm:$0xf]
    %v1014 = vld [vmem:[%s5 + $0x10] sm:$0xf]
    %v1015 = vld [vmem:[%s5 + $0x14] sm:$0xf]
    %v1016 = vld [vmem:[%s5 + $0x18] sm:$0xf]
    %v1017 = vld [vmem:[%s5 + $0x1c] sm:$0xf]
    %v1018 = vld [vmem:[%s5 + $0x20] sm:$0xf]
    %v1019 = vld [vmem:[%s5 + $0x24] sm:$0xf]
    %v1020 = vld [vmem:[%s5 + $0x28] sm:$0xf]
    %v1021 = vld [vmem:[%s5 + $0x2c] sm:$0xf]
    %v1022 = vld [vmem:[%s5 + $0x30] sm:$0xf]
    %v1023 = vld [vmem:[%s5 + $0x34] sm:$0xf]
    %v1024 = vld [vmem:[%s5 + $0x38] sm:$0xf]
    %v1025 = vld [vmem:[%s5 + $0x3c] sm:$0xf]
    %v1026 = vld [vmem:[%s6] sm:$0x1]
    %v1028 = vlaneseq
    %v1029 = vshrl.u32 %v1028, 7
    %v1030 = vsub.s32 0, %v1029
    %v1031 = vrot.slane %v1026, %v1030
    %v1049 = vunpack.c.l.b16 %v1010
    %v1050 = vunpack.c.l.b16 %v1011
    %v1051 = vunpack.c.l.b16 %v1012
    %v1052 = vunpack.c.l.b16 %v1013
    %v1053 = vunpack.c.l.b16 %v1014
    %v1054 = vunpack.c.l.b16 %v1015
    %v1055 = vunpack.c.l.b16 %v1016
    %v1056 = vunpack.c.l.b16 %v1017
    %v1057 = vunpack.c.l.b16 %v1018
    %v1058 = vunpack.c.l.b16 %v1019
    %v1059 = vunpack.c.l.b16 %v1020
    %v1060 = vunpack.c.l.b16 %v1021
    %v1061 = vunpack.c.l.b16 %v1022
    %v1062 = vunpack.c.l.b16 %v1023
    %v1063 = vunpack.c.l.b16 %v1024
    %v1064 = vunpack.c.l.b16 %v1025
    %v1065 = vpack.c.b16 %v1050, %v1049
    %v1066 = vpack.c.b16 %v1052, %v1051
    %v1067 = vpack.c.b16 %v1054, %v1053
    %v1068 = vpack.c.b16 %v1056, %v1055
    %v1069 = vpack.c.b16 %v1058, %v1057
    %v1070 = vpack.c.b16 %v1060, %v1059
    %v1071 = vpack.c.b16 %v1062, %v1061
    %v1072 = vpack.c.b16 %v1064, %v1063
    %1081 = vmatprep.subr.bf16.mxu0 0
    %1082 = vmatpush1.bf16.msra.mxu0 %v1065
    %1083 = vmatprep.subr.bf16.mxu0 0
    %1084 = vmatpush1.bf16.msra.mxu0 %v1066
    %1085 = vmatprep.subr.bf16.mxu0 0
    %1086 = vmatpush1.bf16.msra.mxu0 %v1067
    %1087 = vmatprep.subr.bf16.mxu0 0
    %1088 = vmatpush1.bf16.msra.mxu0 %v1068
    %1089 = vmatprep.subr.bf16.mxu0 0
    %1090 = vmatpush1.bf16.msra.mxu0 %v1069
    %1091 = vmatprep.subr.bf16.mxu0 0
    %1092 = vmatpush1.bf16.msra.mxu0 %v1070
    %1093 = vmatprep.subr.bf16.mxu0 0
    %1094 = vmatpush1.bf16.msra.mxu0 %v1071
    %1095 = vmatprep.subr.bf16.mxu0 0
    %1096 = vmatpush1.bf16.msra.mxu0 %v1072
    %1097 = vmatprep.subr.bf16.mxu0 0
    %1098 = vmatpush1.bf16.msra.mxu0 0
    %1099 = vmatprep.subr.bf16.mxu0 0
    %1100 = vmatpush1.bf16.msra.mxu0 0
    %1101 = vmatprep.subr.bf16.mxu0 0
    %1102 = vmatpush1.bf16.msra.mxu0 0
    %1103 = vmatprep.subr.bf16.mxu0 0
    %1104 = vmatpush1.bf16.msra.mxu0 0
    %1105 = vmatprep.subr.bf16.mxu0 0
    %1106 = vmatpush1.bf16.msra.mxu0 0
    %1107 = vmatprep.subr.bf16.mxu0 0
    %1108 = vmatpush1.bf16.msra.mxu0 0
    %1109 = vmatprep.subr.bf16.mxu0 0
    %1110 = vmatpush1.bf16.msra.mxu0 0
    %1111 = vmatprep.subr.bf16.mxu0 0
    %1112 = vmatpush1.bf16.msra.mxu0 0
    %1113 = vmatprep.mubr.bf16.mxu0 0
    %1114 = vmatmul.mubr.bf16.gmra.mrb[0].mxu0 %v1009
    %v1115 = vpop.f32.mrb[0].mxu0
    %v1116 = vadd.f32 %v1031, %v1115
    %v1117 = vpop.f32.mrb[0].mxu0
    %v1118 = vpop.f32.mrb[0].mxu0
    %v1119 = vpop.f32.mrb[0].mxu0
    %1120 = vdwg.mxu0
    %v1121 = vmax.f32 %v1116, 0.0
    %v1122 = vpack.c.bf16 %v1121, %v1121
    %v1123 = vld [vmem:[#allocation6] sm:$0xf]
    %v1124 = vld [vmem:[#allocation6 + $0x4] sm:$0xf]
    %v1125 = vld [vmem:[#allocation6 + $0x8] sm:$0xf]
    %v1126 = vld [vmem:[#allocation6 + $0xc] sm:$0xf]
    %v1127 = vld [vmem:[#allocation6 + $0x10] sm:$0xf]
    %v1128 = vld [vmem:[#allocation6 + $0x14] sm:$0xf]
    %v1129 = vld [vmem:[#allocation6 + $0x18] sm:$0xf]
    %v1130 = vld [vmem:[#allocation6 + $0x1c] sm:$0xf]
    %v1131 = vld [vmem:[#allocation6 + $0x20] sm:$0xf]
    %v1132 = vld [vmem:[#allocation6 + $0x24] sm:$0xf]
    %v1133 = vld [vmem:[#allocation6 + $0x28] sm:$0xf]
    %v1134 = vld [vmem:[#allocation6 + $0x2c] sm:$0xf]
    %v1135 = vld [vmem:[#allocation6 + $0x30] sm:$0xf]
    %v1136 = vld [vmem:[#allocation6 + $0x34] sm:$0xf]
    %v1137 = vld [vmem:[#allocation6 + $0x38] sm:$0xf]
    %v1138 = vld [vmem:[#allocation6 + $0x3c] sm:$0xf]
    %v1139 = vld [vmem:[%s8] sm:$0x1]
    %v1141 = vlaneseq
    %v1142 = vshrl.u32 %v1141, 7
    %v1143 = vsub.s32 0, %v1142
    %v1144 = vrot.slane %v1139, %v1143
    %v1162 = vunpack.c.l.b16 %v1123
    %v1163 = vunpack.c.l.b16 %v1124
    %v1164 = vunpack.c.l.b16 %v1125
    %v1165 = vunpack.c.l.b16 %v1126
    %v1166 = vunpack.c.l.b16 %v1127
    %v1167 = vunpack.c.l.b16 %v1128
    %v1168 = vunpack.c.l.b16 %v1129
    %v1169 = vunpack.c.l.b16 %v1130
    %v1170 = vunpack.c.l.b16 %v1131
    %v1171 = vunpack.c.l.b16 %v1132
    %v1172 = vunpack.c.l.b16 %v1133
    %v1173 = vunpack.c.l.b16 %v1134
    %v1174 = vunpack.c.l.b16 %v1135
    %v1175 = vunpack.c.l.b16 %v1136
    %v1176 = vunpack.c.l.b16 %v1137
    %v1177 = vunpack.c.l.b16 %v1138
    %v1178 = vpack.c.b16 %v1163, %v1162
    %v1179 = vpack.c.b16 %v1165, %v1164
    %v1180 = vpack.c.b16 %v1167, %v1166
    %v1181 = vpack.c.b16 %v1169, %v1168
    %v1182 = vpack.c.b16 %v1171, %v1170
    %v1183 = vpack.c.b16 %v1173, %v1172
    %v1184 = vpack.c.b16 %v1175, %v1174
    %v1185 = vpack.c.b16 %v1177, %v1176
    %1194 = vmatprep.subr.bf16.mxu0 0
    %1195 = vmatpush1.bf16.msra.mxu0 %v1178
    %1196 = vmatprep.subr.bf16.mxu0 0
    %1197 = vmatpush1.bf16.msra.mxu0 %v1179
    %1198 = vmatprep.subr.bf16.mxu0 0
    %1199 = vmatpush1.bf16.msra.mxu0 %v1180
    %1200 = vmatprep.subr.bf16.mxu0 0
    %1201 = vmatpush1.bf16.msra.mxu0 %v1181
    %1202 = vmatprep.subr.bf16.mxu0 0
    %1203 = vmatpush1.bf16.msra.mxu0 %v1182
    %1204 = vmatprep.subr.bf16.mxu0 0
    %1205 = vmatpush1.bf16.msra.mxu0 %v1183
    %1206 = vmatprep.subr.bf16.mxu0 0
    %1207 = vmatpush1.bf16.msra.mxu0 %v1184
    %1208 = vmatprep.subr.bf16.mxu0 0
    %1209 = vmatpush1.bf16.msra.mxu0 %v1185
    %1210 = vmatprep.subr.bf16.mxu0 0
    %1211 = vmatpush1.bf16.msra.mxu0 0
    %1212 = vmatprep.subr.bf16.mxu0 0
    %1213 = vmatpush1.bf16.msra.mxu0 0
    %1214 = vmatprep.subr.bf16.mxu0 0
    %1215 = vmatpush1.bf16.msra.mxu0 0
    %1216 = vmatprep.subr.bf16.mxu0 0
    %1217 = vmatpush1.bf16.msra.mxu0 0
    %1218 = vmatprep.subr.bf16.mxu0 0
    %1219 = vmatpush1.bf16.msra.mxu0 0
    %1220 = vmatprep.subr.bf16.mxu0 0
    %1221 = vmatpush1.bf16.msra.mxu0 0
    %1222 = vmatprep.subr.bf16.mxu0 0
    %1223 = vmatpush1.bf16.msra.mxu0 0
    %1224 = vmatprep.subr.bf16.mxu0 0
    %1225 = vmatpush1.bf16.msra.mxu0 0
    %1226 = vmatprep.mubr.bf16.mxu0 0
    %1227 = vmatmul.mubr.bf16.gmra.mrb[0].mxu0 %v1122
    %v1228 = vpop.f32.mrb[0].mxu0
    %v1229 = vadd.f32 %v1144, %v1228
    %v1230 = vpop.f32.mrb[0].mxu0
    %v1231 = vpop.f32.mrb[0].mxu0
    %v1232 = vpop.f32.mrb[0].mxu0
    %1233 = vdwg.mxu0
    %v1234 = vmax.f32 %v1229, 0.0
    %v1235 = vpack.c.bf16 %v1234, %v1234
    %v1236 = vld [vmem:[#allocation7] sm:$0xf]
    %v1237 = vld [vmem:[#allocation7 + $0x4] sm:$0xf]
    %v1238 = vld [vmem:[#allocation7 + $0x8] sm:$0xf]
    %v1239 = vld [vmem:[#allocation7 + $0xc] sm:$0xf]
    %v1240 = vld [vmem:[#allocation7 + $0x10] sm:$0xf]
    %v1241 = vld [vmem:[#allocation7 + $0x14] sm:$0xf]
    %v1242 = vld [vmem:[#allocation7 + $0x18] sm:$0xf]
    %v1243 = vld [vmem:[#allocation7 + $0x1c] sm:$0xf]
    %v1244 = vld [vmem:[#allocation7 + $0x20] sm:$0xf]
    %v1245 = vld [vmem:[#allocation7 + $0x24] sm:$0xf]
    %v1246 = vld [vmem:[#allocation7 + $0x28] sm:$0xf]
    %v1247 = vld [vmem:[#allocation7 + $0x2c] sm:$0xf]
    %v1248 = vld [vmem:[#allocation7 + $0x30] sm:$0xf]
    %v1249 = vld [vmem:[#allocation7 + $0x34] sm:$0xf]
    %v1250 = vld [vmem:[#allocation7 + $0x38] sm:$0xf]
    %v1251 = vld [vmem:[#allocation7 + $0x3c] sm:$0xf]
    %v1252 = vld [vmem:[%s10] sm:$0x1]
    %v1254 = vlaneseq
    %v1255 = vshrl.u32 %v1254, 7
    %v1256 = vsub.s32 0, %v1255
    %v1257 = vrot.slane %v1252, %v1256
    %v1275 = vunpack.c.l.b16 %v1236
    %v1276 = vunpack.c.l.b16 %v1237
    %v1277 = vunpack.c.l.b16 %v1238
    %v1278 = vunpack.c.l.b16 %v1239
    %v1279 = vunpack.c.l.b16 %v1240
    %v1280 = vunpack.c.l.b16 %v1241
    %v1281 = vunpack.c.l.b16 %v1242
    %v1282 = vunpack.c.l.b16 %v1243
    %v1283 = vunpack.c.l.b16 %v1244
    %v1284 = vunpack.c.l.b16 %v1245
    %v1285 = vunpack.c.l.b16 %v1246
    %v1286 = vunpack.c.l.b16 %v1247
    %v1287 = vunpack.c.l.b16 %v1248
    %v1288 = vunpack.c.l.b16 %v1249
    %v1289 = vunpack.c.l.b16 %v1250
    %v1290 = vunpack.c.l.b16 %v1251
    %v1291 = vpack.c.b16 %v1276, %v1275
    %v1292 = vpack.c.b16 %v1278, %v1277
    %v1293 = vpack.c.b16 %v1280, %v1279
    %v1294 = vpack.c.b16 %v1282, %v1281
    %v1295 = vpack.c.b16 %v1284, %v1283
    %v1296 = vpack.c.b16 %v1286, %v1285
    %v1297 = vpack.c.b16 %v1288, %v1287
    %v1298 = vpack.c.b16 %v1290, %v1289
    %1307 = vmatprep.subr.bf16.mxu0 0
    %1308 = vmatpush1.bf16.msra.mxu0 %v1291
    %1309 = vmatprep.subr.bf16.mxu0 0
    %1310 = vmatpush1.bf16.msra.mxu0 %v1292
    %1311 = vmatprep.subr.bf16.mxu0 0
    %1312 = vmatpush1.bf16.msra.mxu0 %v1293
    %1313 = vmatprep.subr.bf16.mxu0 0
    %1314 = vmatpush1.bf16.msra.mxu0 %v1294
    %1315 = vmatprep.subr.bf16.mxu0 0
    %1316 = vmatpush1.bf16.msra.mxu0 %v1295
    %1317 = vmatprep.subr.bf16.mxu0 0
    %1318 = vmatpush1.bf16.msra.mxu0 %v1296
    %1319 = vmatprep.subr.bf16.mxu0 0
    %1320 = vmatpush1.bf16.msra.mxu0 %v1297
    %1321 = vmatprep.subr.bf16.mxu0 0
    %1322 = vmatpush1.bf16.msra.mxu0 %v1298
    %1323 = vmatprep.subr.bf16.mxu0 0
    %1324 = vmatpush1.bf16.msra.mxu0 0
    %1325 = vmatprep.subr.bf16.mxu0 0
    %1326 = vmatpush1.bf16.msra.mxu0 0
    %1327 = vmatprep.subr.bf16.mxu0 0
    %1328 = vmatpush1.bf16.msra.mxu0 0
    %1329 = vmatprep.subr.bf16.mxu0 0
    %1330 = vmatpush1.bf16.msra.mxu0 0
    %1331 = vmatprep.subr.bf16.mxu0 0
    %1332 = vmatpush1.bf16.msra.mxu0 0
    %1333 = vmatprep.subr.bf16.mxu0 0
    %1334 = vmatpush1.bf16.msra.mxu0 0
    %1335 = vmatprep.subr.bf16.mxu0 0
    %1336 = vmatpush1.bf16.msra.mxu0 0
    %1337 = vmatprep.subr.bf16.mxu0 0
    %1338 = vmatpush1.bf16.msra.mxu0 0
    %1339 = vmatprep.mubr.bf16.mxu0 0
    %1340 = vmatmul.mubr.bf16.gmra.mrb[0].mxu0 %v1235
    %v1341 = vpop.f32.mrb[0].mxu0
    %v1342 = vadd.f32 %v1257, %v1341
    %v1343 = vpop.f32.mrb[0].mxu0
    %v1344 = vpop.f32.mrb[0].mxu0
    %v1345 = vpop.f32.mrb[0].mxu0
    %1346 = vdwg.mxu0
    %v1347 = vpack.c.bf16 %v1342, %v1342
    %1348 = vst [vmem:[%s11] sm:$0xf] %v1347
    // Predicated region
    $region62: #{_lambda_.1} parent=1 // pred_check
      _
    $region63: #{_lambda_.1} parent=1 // pred_check_branch
      %1350 = sbr.rel (0) target = $region65
    $region64: #{_lambda_.1} parent=1 // pred_region
      _
    $region65: #{_lambda_.1} parent=1 // pred_fallthru
      _
    // Predicated region
    $region66: #{_lambda_.1} parent=1 // pred_check
      _
    $region67: #{_lambda_.1} parent=1 // pred_check_branch
      %1352 = sbr.rel (0) target = $region69
    $region68: #{_lambda_.1} parent=1 // pred_region
      _
    $region69: #{_lambda_.1} parent=1 // pred_fallthru
      _
    %1353 = vsyncpa [#allocation3], 1
    %1354 = vsyncpa [#allocation5], 1
    %1355 = vsyncpa [#allocation8], 1

</llo_original>
